<compile_context>
chip_gen: v6e
topology: v6e:2x2x1
jax: 0.10.0
libtpu: 0.0.40
codegen_flags: <defaults>
</compile_context>

<pallas_src>
import jax
import jax.numpy as jnp
from jax.experimental import pallas as pl
from jax.experimental.pallas import tpu as pltpu


_ACC_W_MAX = 512  # width of the narrow VMEM accumulators (lanes)


def _make_miou_kernel(num_classes, tile, acc_w, hw, tiles_per_chunk):
    needs_mask = (hw % tile) != 0          # static: mask code only if needed
    n_chunks = tile // acc_w               # static, <= 16 for tile<=8192

    def kernel(x_ref, lbl_ref, inter_ref, card_ref, inter_acc, card_acc):
        i = pl.program_id(2)

        @pl.when(i == 0)
        def _init():
            inter_acc[...] = jnp.zeros_like(inter_acc)
            card_acc[...] = jnp.zeros_like(card_acc)

        # Class-index plane generated in-register (viota + vcmp are cheap VPU
        # work; no VMEM scratch load per step).  Hoisted out of the chunk loop.
        cls = jax.lax.broadcasted_iota(jnp.int32, (num_classes, acc_w), 0)

        if needs_mask:
            tile_idx = pl.program_id(1) * tiles_per_chunk + i
            lane = jax.lax.broadcasted_iota(jnp.int32, (1, acc_w), 1)

        inter_part = None
        card_part = None

        # Static inner loop over acc_w-wide lane chunks of the input block:
        # all intermediates are (C, acc_w) and stay in vregs; the partials
        # are carried in registers and hit VMEM only once per grid step.
        for c in range(n_chunks):
            lo = c * acc_w
            x = x_ref[:, lo:lo + acc_w].astype(jnp.float32)   # (C, acc_w)
            lbl = lbl_ref[:, lo:lo + acc_w]                    # (1, acc_w) i32

            # Softmax over the class (sublane) axis.  One EUP reciprocal of
            # the (1, acc_w) denominator + C multiplies, no VALU divides.
            m = jnp.max(x, axis=0, keepdims=True)
            e = jnp.exp(x - m)
            denom = jnp.sum(e, axis=0, keepdims=True)
            p = e * pl.reciprocal(denom, approx=False)         # (C, acc_w)

            hit = cls == lbl                                   # (C, acc_w)

            if needs_mask:
                # Tail tile: zero padded lanes so garbage logits / labels
                # contribute nothing.  jnp.where (not multiply) so NaNs in
                # padded columns cannot propagate.
                remaining = hw - (tile_idx * tile + lo)
                valid = lane < remaining                       # (1, acc_w)
                p = jnp.where(valid, p, 0.0)
                hit = jnp.logical_and(hit, valid)

            onehot = hit.astype(jnp.float32)
            ic = jnp.where(hit, p, 0.0)                        # intersection
            cc = p + onehot                                    # cardinality
            inter_part = ic if inter_part is None else inter_part + ic
            card_part = cc if card_part is None else card_part + cc

        # One narrow RMW per grid step (keeps the vst slot off the crit path).
        inter_acc[...] += inter_part
        card_acc[...] += card_part

        @pl.when(i == pl.num_programs(2) - 1)
        def _finalize():
            inter_ref[...] = jnp.sum(inter_acc[...], axis=1, keepdims=True)
            card_ref[...] = jnp.sum(card_acc[...], axis=1, keepdims=True)

    return kernel


def _default_vmem_budget():
    """Generation-aware VMEM budget for input tiles (leaves pipeline headroom)."""
    try:
        info = pltpu.get_tpu_info()
        cap = int(getattr(info, "vmem_capacity_bytes", 64 * 1024 * 1024))
    except Exception:
        cap = 64 * 1024 * 1024
    # v5e/v6e (128 MiB): 20 MiB budget; v7x (64 MiB per TC): 16 MiB budget.
    return int(min(20 * 1024 * 1024, cap // 4))


def _pick_tile(hw, num_classes, logit_bytes, vmem_budget_bytes, max_tile=8192):
    """Largest legal lane tile under the VMEM budget, preferring one that
    divides HW so the tail-mask path is statically compiled out."""
    if hw <= 128:
        return hw  # full extent: exempt from the 128-lane divisibility rule
    # Per-lane VMEM: double-buffered logits + labels.  Accumulators are now
    # narrow (C, _ACC_W_MAX) planes -> a fixed cost, not per-lane.
    per_lane = 2 * (num_classes * logit_bytes + 4)
    fixed = 2 * num_classes * _ACC_W_MAX * 4
    budget_lanes = max(128, (vmem_budget_bytes - fixed) // per_lane)
    if hw <= max_tile and budget_lanes >= hw:
        return hw  # single full-extent tile, no mask needed
    cap = int(min(budget_lanes, hw, max_tile))
    cap = max(128, (cap // 128) * 128)
    for t in range(cap, 127, -128):   # prefer a divisor of HW (no tail mask)
        if hw % t == 0:
            return t
    return cap


def _pick_acc_width(tile):
    for w in (_ACC_W_MAX, 256, 128):
        if tile % w == 0:
            return w
    return tile  # full-extent / small-hw tiles that aren't 128-multiples


def miou_pallas(logits, true, eps=1e-7, tile=None, vmem_budget_bytes=None):
    """logits: (N, C, H, W) float; true: (N, 1, H, W) or (N, H, W) int."""
    N, C, H, W = logits.shape
    HW = H * W

    # Free, contiguous reshapes only -- no HBM transpose pass.
    x = logits.reshape(N, C, HW)
    lbl = jnp.reshape(true, (N, 1, HW)).astype(jnp.int32)

    if vmem_budget_bytes is None:
        vmem_budget_bytes = _default_vmem_budget()

    if HW <= 128:
        tile = HW
    elif tile is None:
        tile = _pick_tile(HW, C, x.dtype.itemsize, vmem_budget_bytes)
    else:
        # Validate / round a user-provided tile to keep the (8,128) rule.
        tile = int(tile)
        tile = HW if tile >= HW else max(128, (tile // 128) * 128)

    num_tiles = pl.cdiv(HW, tile)
    # v7x dual-TensorCore: when N == 1 give the second core work by splitting
    # HW into two parallel super-chunks (no-op on single-TC v5e/v6e).
    P = 2 if (N == 1 and num_tiles >= 2 and num_tiles % 2 == 0) else 1
    tiles_per_chunk = num_tiles // P
    acc_w = _pick_acc_width(tile)

    kernel = _make_miou_kernel(C, tile, acc_w, HW, tiles_per_chunk)

    inter_part, card_part = pl.pallas_call(
        kernel,
        out_shape=(
            jax.ShapeDtypeStruct((N, P, C, 1), jnp.float32),
            jax.ShapeDtypeStruct((N, P, C, 1), jnp.float32),
        ),
        grid_spec=pltpu.PrefetchScalarGridSpec(
            num_scalar_prefetch=0,
            grid=(N, P, tiles_per_chunk),
            in_specs=[
                pl.BlockSpec((pl.Squeezed(), C, tile),
                             lambda n, p, i: (n, 0, p * tiles_per_chunk + i)),
                pl.BlockSpec((pl.Squeezed(), 1, tile),
                             lambda n, p, i: (n, 0, p * tiles_per_chunk + i)),
            ],
            out_specs=[
                pl.BlockSpec((pl.Squeezed(), pl.Squeezed(), C, 1),
                             lambda n, p, i: (n, p, 0, 0)),
                pl.BlockSpec((pl.Squeezed(), pl.Squeezed(), C, 1),
                             lambda n, p, i: (n, p, 0, 0)),
            ],
            scratch_shapes=[
                pltpu.VMEM((C, acc_w), jnp.float32),   # intersection acc
                pltpu.VMEM((C, acc_w), jnp.float32),   # cardinality acc
            ],
        ),
        compiler_params=pltpu.CompilerParams(
            # Batch and super-chunk axes shard across TensorCores; the tile
            # axis carries the accumulators and stays 'arbitrary'.
            dimension_semantics=("parallel", "parallel", "arbitrary"),
            # Raise v5e's 16 MiB default; matches the v6e/v7x scoped default.
            vmem_limit_bytes=32 * 1024 * 1024,
        ),
    )(x, lbl)

    inter = jnp.sum(inter_part[..., 0], axis=(0, 1))   # (C,)
    card = jnp.sum(card_part[..., 0], axis=(0, 1))     # (C,)
    union = card - inter
    return inter / (union + eps)


def miou_reference(logits, true, eps=1e-7):
    """Pure-JAX reference mirroring the PyTorch forward."""
    N, C, H, W = logits.shape
    lbl = jnp.reshape(true, (N, H, W))
    onehot = jax.nn.one_hot(lbl, C, dtype=jnp.float32)          # (N,H,W,C)
    onehot = jnp.transpose(onehot, (0, 3, 1, 2))                 # (N,C,H,W)
    probas = jax.nn.softmax(logits.astype(jnp.float32), axis=1)
    dims = (0, 2, 3)
    inter = jnp.sum(probas * onehot, axis=dims)
    card = jnp.sum(probas + onehot, axis=dims)
    union = card - inter
    return inter / (union + eps)


if __name__ == "__main__":
    key = jax.random.PRNGKey(0)
    k1, k2 = jax.random.split(key)

    N, C, H, W = 2, 4, 16, 16
    logits = jax.random.normal(k1, (N, C, H, W), dtype=jnp.float32)
    true = jax.random.randint(k2, (N, 1, H, W), 0, C, dtype=jnp.int32)

    iou = miou_pallas(logits, true)
    jax.block_until_ready(iou)

    ref = miou_reference(logits, true)
    assert iou.shape == (C,)
    assert jnp.allclose(iou, ref, atol=1e-5, rtol=1e-5), (iou, ref)

    # NOTE: the PyTorch module returns a numpy array (.detach().cpu().numpy());
    # callers can apply np.asarray(iou) — the host transfer stays outside the kernel.
    print("KERNEL_OK")
</pallas_src>

<mosaic_0001>
module attributes {stable_mosaic.version = 11 : i64} {
  func.func @kernel(%arg0: i32, %arg1: i32, %arg2: i32, %arg3: memref<1x4x256xf32, #tpu.memory_space<vmem>>, %arg4: memref<1x1x256xi32, #tpu.memory_space<vmem>>, %arg5: memref<1x1x4x1xf32, #tpu.memory_space<vmem>>, %arg6: memref<1x1x4x1xf32, #tpu.memory_space<vmem>>, %arg7: memref<4x256xf32, #tpu.memory_space<vmem>>, %arg8: memref<4x256xf32, #tpu.memory_space<vmem>>) attributes {dimension_semantics = [#tpu.dimension_semantics<parallel>, #tpu.dimension_semantics<parallel>, #tpu.dimension_semantics<arbitrary>], iteration_bounds = array<i64: 2, 1, 1>, scalar_prefetch = 0 : i64, scratch_operands = 2 : i64, tpu.core_type = #tpu.core_type<tc>, window_params = [{transform_indices = @transform_0, window_bounds = array<i64: 1, 4, 256>}, {transform_indices = @transform_1, window_bounds = array<i64: 1, 1, 256>}, {transform_indices = @transform_2, window_bounds = array<i64: 1, 1, 4, 1>}, {transform_indices = @transform_3, window_bounds = array<i64: 1, 1, 4, 1>}]} {
    %c0_i32 = arith.constant 0 : i32
    %0 = arith.cmpi eq, %arg2, %c0_i32 : i32
    %1 = arith.extui %0 : i1 to i32
    %c0_i32_0 = arith.constant 0 : i32
    %2 = arith.cmpi ne, %1, %c0_i32_0 : i32
    scf.if %2 {
      %cst_18 = arith.constant 0.000000e+00 : f32
      %34 = vector.broadcast %cst_18 : f32 to vector<4x256xf32>
      %c0_19 = arith.constant 0 : index
      %c0_20 = arith.constant 0 : index
      %35 = vector.load %arg7[%c0_19, %c0_20] : memref<4x256xf32, #tpu.memory_space<vmem>>, vector<4x256xf32>
      tpu.vector_store %arg7[%c0_19, %c0_20], %34 {strides = array<i32>} : memref<4x256xf32, #tpu.memory_space<vmem>>, vector<4x256xf32>,
      %cst_21 = arith.constant 0.000000e+00 : f32
      %36 = vector.broadcast %cst_21 : f32 to vector<4x256xf32>
      %c0_22 = arith.constant 0 : index
      %c0_23 = arith.constant 0 : index
      %37 = vector.load %arg8[%c0_22, %c0_23] : memref<4x256xf32, #tpu.memory_space<vmem>>, vector<4x256xf32>
      tpu.vector_store %arg8[%c0_22, %c0_23], %36 {strides = array<i32>} : memref<4x256xf32, #tpu.memory_space<vmem>>, vector<4x256xf32>,
    } else {
    }
    %3 = tpu.iota {dimensions = array<i32: 0>} : vector<4x256xi32>
    %c0 = arith.constant 0 : index
    %c0_1 = arith.constant 0 : index
    %c0_2 = arith.constant 0 : index
    %4 = vector.load %arg3[%c0, %c0_1, %c0_2] : memref<1x4x256xf32, #tpu.memory_space<vmem>>, vector<1x4x256xf32>
    %5 = vector.shape_cast %4 : vector<1x4x256xf32> to vector<4x256xf32>
    %c0_3 = arith.constant 0 : index
    %c0_4 = arith.constant 0 : index
    %c0_5 = arith.constant 0 : index
    %6 = vector.load %arg4[%c0_3, %c0_4, %c0_5] : memref<1x1x256xi32, #tpu.memory_space<vmem>>, vector<1x1x256xi32>
    %7 = vector.shape_cast %6 : vector<1x1x256xi32> to vector<1x256xi32>
    %cst = arith.constant dense<0xFF800000> : vector<256xf32>
    %8 = vector.multi_reduction <maximumf>, %5, %cst [0] : vector<4x256xf32> to vector<256xf32>
    %9 = vector.shape_cast %8 : vector<256xf32> to vector<1x256xf32>
    %10 = vector.broadcast %9 : vector<1x256xf32> to vector<4x256xf32>
    %11 = arith.subf %5, %10 : vector<4x256xf32>
    %12 = math.exp %11 : vector<4x256xf32>
    %cst_6 = arith.constant dense<0.000000e+00> : vector<256xf32>
    %13 = vector.multi_reduction <add>, %12, %cst_6 [0] : vector<4x256xf32> to vector<256xf32>
    %14 = vector.shape_cast %13 : vector<256xf32> to vector<1x256xf32>
    %15 = tpu.reciprocal %14 : vector<1x256xf32> -> vector<1x256xf32>
    %16 = vector.broadcast %15 : vector<1x256xf32> to vector<4x256xf32>
    %17 = arith.mulf %12, %16 : vector<4x256xf32>
    %18 = vector.broadcast %7 : vector<1x256xi32> to vector<4x256xi32>
    %19 = arith.cmpi eq, %3, %18 : vector<4x256xi32>
    %20 = arith.extui %19 : vector<4x256xi1> to vector<4x256xi32>
    %21 = arith.sitofp %20 : vector<4x256xi32> to vector<4x256xf32>
    %cst_7 = arith.constant 0.000000e+00 : f32
    %22 = vector.broadcast %cst_7 : f32 to vector<4x256xf32>
    %23 = arith.select %19, %17, %22 : vector<4x256xi1>, vector<4x256xf32>
    %24 = arith.addf %17, %21 : vector<4x256xf32>
    %c0_8 = arith.constant 0 : index
    %c0_9 = arith.constant 0 : index
    %25 = vector.load %arg7[%c0_8, %c0_9] : memref<4x256xf32, #tpu.memory_space<vmem>>, vector<4x256xf32>
    %26 = arith.addf %25, %23 : vector<4x256xf32>
    %c0_10 = arith.constant 0 : index
    %c0_11 = arith.constant 0 : index
    %27 = vector.load %arg7[%c0_10, %c0_11] : memref<4x256xf32, #tpu.memory_space<vmem>>, vector<4x256xf32>
    tpu.vector_store %arg7[%c0_10, %c0_11], %26 {strides = array<i32>} : memref<4x256xf32, #tpu.memory_space<vmem>>, vector<4x256xf32>,
    %c0_12 = arith.constant 0 : index
    %c0_13 = arith.constant 0 : index
    %28 = vector.load %arg8[%c0_12, %c0_13] : memref<4x256xf32, #tpu.memory_space<vmem>>, vector<4x256xf32>
    %29 = arith.addf %28, %24 : vector<4x256xf32>
    %c0_14 = arith.constant 0 : index
    %c0_15 = arith.constant 0 : index
    %30 = vector.load %arg8[%c0_14, %c0_15] : memref<4x256xf32, #tpu.memory_space<vmem>>, vector<4x256xf32>
    tpu.vector_store %arg8[%c0_14, %c0_15], %29 {strides = array<i32>} : memref<4x256xf32, #tpu.memory_space<vmem>>, vector<4x256xf32>,
    %c0_i32_16 = arith.constant 0 : i32
    %31 = arith.cmpi eq, %arg2, %c0_i32_16 : i32
    %32 = arith.extui %31 : i1 to i32
    %c0_i32_17 = arith.constant 0 : i32
    %33 = arith.cmpi ne, %32, %c0_i32_17 : i32
    scf.if %33 {
      %c0_18 = arith.constant 0 : index
      %c0_19 = arith.constant 0 : index
      %34 = vector.load %arg7[%c0_18, %c0_19] : memref<4x256xf32, #tpu.memory_space<vmem>>, vector<4x256xf32>
      %cst_20 = arith.constant dense<0.000000e+00> : vector<4xf32>
      %35 = vector.multi_reduction <add>, %34, %cst_20 [1] : vector<4x256xf32> to vector<4xf32>
      %36 = vector.shape_cast %35 : vector<4xf32> to vector<4x1xf32>
      %c0_21 = arith.constant 0 : index
      %c0_22 = arith.constant 0 : index
      %c0_23 = arith.constant 0 : index
      %c0_24 = arith.constant 0 : index
      %37 = vector.load %arg5[%c0_21, %c0_22, %c0_23, %c0_24] : memref<1x1x4x1xf32, #tpu.memory_space<vmem>>, vector<1x1x4x1xf32>
      %38 = vector.shape_cast %37 : vector<1x1x4x1xf32> to vector<4x1xf32>
      %39 = vector.shape_cast %36 : vector<4x1xf32> to vector<1x1x4x1xf32>
      tpu.vector_store %arg5[%c0_21, %c0_22, %c0_23, %c0_24], %39 {strides = array<i32>} : memref<1x1x4x1xf32, #tpu.memory_space<vmem>>, vector<1x1x4x1xf32>,
      %c0_25 = arith.constant 0 : index
      %c0_26 = arith.constant 0 : index
      %40 = vector.load %arg8[%c0_25, %c0_26] : memref<4x256xf32, #tpu.memory_space<vmem>>, vector<4x256xf32>
      %cst_27 = arith.constant dense<0.000000e+00> : vector<4xf32>
      %41 = vector.multi_reduction <add>, %40, %cst_27 [1] : vector<4x256xf32> to vector<4xf32>
      %42 = vector.shape_cast %41 : vector<4xf32> to vector<4x1xf32>
      %c0_28 = arith.constant 0 : index
      %c0_29 = arith.constant 0 : index
      %c0_30 = arith.constant 0 : index
      %c0_31 = arith.constant 0 : index
      %43 = vector.load %arg6[%c0_28, %c0_29, %c0_30, %c0_31] : memref<1x1x4x1xf32, #tpu.memory_space<vmem>>, vector<1x1x4x1xf32>
      %44 = vector.shape_cast %43 : vector<1x1x4x1xf32> to vector<4x1xf32>
      %45 = vector.shape_cast %42 : vector<4x1xf32> to vector<1x1x4x1xf32>
      tpu.vector_store %arg6[%c0_28, %c0_29, %c0_30, %c0_31], %45 {strides = array<i32>} : memref<1x1x4x1xf32, #tpu.memory_space<vmem>>, vector<1x1x4x1xf32>,
    } else {
    }
    return
  }
  func.func @transform_0(%arg0: i32, %arg1: i32, %arg2: i32) -> (i32, i32, i32) {
    %c1_i32 = arith.constant 1 : i32
    %0 = arith.muli %arg1, %c1_i32 : i32
    %1 = arith.addi %0, %arg2 : i32
    %c0_i32 = arith.constant 0 : i32
    %c0_i32_0 = arith.constant 0 : i32
    return %arg0, %c0_i32, %1 : i32, i32, i32
  }
  func.func @transform_1(%arg0: i32, %arg1: i32, %arg2: i32) -> (i32, i32, i32) {
    %c1_i32 = arith.constant 1 : i32
    %0 = arith.muli %arg1, %c1_i32 : i32
    %1 = arith.addi %0, %arg2 : i32
    %c0_i32 = arith.constant 0 : i32
    %c0_i32_0 = arith.constant 0 : i32
    return %arg0, %c0_i32, %1 : i32, i32, i32
  }
  func.func @transform_2(%arg0: i32, %arg1: i32, %arg2: i32) -> (i32, i32, i32, i32) {
    %c0_i32 = arith.constant 0 : i32
    %c0_i32_0 = arith.constant 0 : i32
    %c0_i32_1 = arith.constant 0 : i32
    return %arg0, %arg1, %c0_i32, %c0_i32_0 : i32, i32, i32, i32
  }
  func.func @transform_3(%arg0: i32, %arg1: i32, %arg2: i32) -> (i32, i32, i32, i32) {
    %c0_i32 = arith.constant 0 : i32
    %c0_i32_0 = arith.constant 0 : i32
    %c0_i32_1 = arith.constant 0 : i32
    return %arg0, %arg1, %c0_i32, %c0_i32_0 : i32, i32, i32, i32
  }
}

</mosaic_0001>

<llo_original>
// kernel: tpu_custom_call.1
$region0: #{tpu_custom_call.1}
  #allocation0 [shape = 'u32[]', space=smem, size = 0x4, offset = 0x4, fixed_abs, tag = 'smem constant byte address 0x4 - core index']
  #allocation1 [shape = 'u32[144,128]{1,0:T(1,128)}', space=vmem, size = 0x12000, scoped, tag = 'internal scratch']
  #allocation2 [shape = 'f32[4,256]{1,0:T(4,128)}', space=vmem, size = 0x1000, scoped, tag = 'scratch operand']
  #allocation3 [shape = 'f32[4,256]{1,0:T(4,128)}', space=vmem, size = 0x1000, scoped, tag = 'scratch operand']
  %s0 = inlined_call_operand.hbm [shape: f32[2,4,256], index: 0, kind: input, shape index: {}]
  %s1 = inlined_call_operand.hbm [shape: s32[2,1,256], index: 1, kind: input, shape index: {}]
  %s2 = inlined_call_operand.vmem [shape: f32[2,1,4,1], index: 2, kind: output, shape index: {0}]
  %s3 = inlined_call_operand.vmem [shape: f32[2,1,4,1], index: 3, kind: output, shape index: {1}]
  %4 = xla_tuple %s2, %s3
  %s5 = sld [smem:[#allocation0]]
  $region65: #{tpu_custom_call.1} parent=0
    _
  %s7 = ssub.s32 1, %s5
  %s8 = scalar_select 0, %s7, %s5
  $region1: #{tpu_custom_call.1} parent=0
    #allocation4 [shape = 'u8[8192]{0}', space=vmem, size = 0x2000, scoped, tag = 'input window, operand 0']
    #allocation5 [shape = 's32[2]{0}', space=sflag, size = 0x8, scoped, tag = 'scoped memory for tpu_custom_call.1']
    #allocation6 [shape = 'u8[2048]{0}', space=vmem, size = 0x800, scoped, tag = 'input window, operand 1']
    #allocation7 [shape = 's32[2]{0}', space=sflag, size = 0x8, scoped, tag = 'scoped memory for tpu_custom_call.1']
    %9 = vsyncpa [#allocation5], 0
    %s10 = scalar_lea.sflag [#allocation5], 1
    %11 = vsyncpa %s10, 0
    %12 = vsyncpa [#allocation7], 0
    %s13 = scalar_lea.sflag [#allocation7], 1
    %14 = vsyncpa %s13, 0
    loop: start=0, step=1, limit=4
    $region2: #{tpu_custom_call.1} parent=1 // loop_pre_header
      _
    $region3: #{tpu_custom_call.1} parent=1 // loop_header
      %s16 = sphi 0, %s20
      %p17 = scmp.ge.s32.totalorder %s16, 4
      %s23 = sphi 0, %s42
      %s24 = sphi 0, %s38
      %s25 = sphi 0, %s34
      %s26 = sphi 0, %s23
      %s27 = sphi 0, %s24
      %s28 = sphi 0, %s25
      %s29 = sphi 0, %s26
      %s30 = sphi 0, %s27
      %s31 = sphi 0, %s28
      %s49 = sphi 0, %s51
      %s52 = sphi 0, %s49
      %s53 = sphi 0, %s52
      %s69 = sphi 0, %s53
      %s79 = sphi 0, %s81
      %s82 = sphi 0, %s79
      %s83 = sphi 0, %s82
      %s99 = sphi 0, %s83
      %s107 = sphi 0, %s109
      %s110 = sphi 0, %s107
      %s111 = sphi 0, %s110
      %s127 = sphi 0, %s111
      %s135 = sphi 0, %s137
      %s138 = sphi 0, %s135
      %s139 = sphi 0, %s138
      %s155 = sphi 0, %s139
    $region4: #{tpu_custom_call.1} parent=1 // loop_header_branch
      %19 = sbr.rel (%p17) target = $region8
    $region5: #{tpu_custom_call.1} parent=1 // loop_body
      %s21 = ssub.s32 %s16, 1
      %s22 = ssub.s32 %s16, 2
      %s32 = sadd.s32 1, %s25
      %p33 = scmp.ge.s32.totalorder %s32, 1
      %s34 = scalar_select %p33, 0, %s32
      %s35 = sadd.s32 1, %s24
      %s36 = scalar_select %p33, %s35, %s24
      %p37 = scmp.ge.s32.totalorder %s36, 1
      %s38 = scalar_select %p37, 0, %s36
      %s39 = sadd.s32 1, %s23
      %s40 = scalar_select %p37, %s39, %s23
      %p41 = scmp.ge.s32.totalorder %s40, 2
      %s42 = scalar_select %p41, 0, %s40
      %s43 = sadd.s32 %s24, %s25
      %s44 = sadd.s32 %s38, %s34
      %s45 = ssub.s32 %s23, %s42
      %s46 = ssub.s32 %s43, %s44
      %s47 = sor.u32 %s45, %s46
      %p48 = scmp.eq.s32.totalorder %s47, 0
      %s50 = sadd.s32 %s49, 1
      %s51 = scalar_select %p48, %s49, %s50
      %p54 = pneg %p48
      %p55 = scmp.eq.s32.totalorder %s16, 1
      %p56 = por %p54, %p55
      %p57 = scmp.ne.s32.totalorder %s49, %s52
      %p58 = scmp.eq.s32.totalorder %s16, 0
      %p59 = por %p57, %p58
      %p60 = scmp.ne.s32.totalorder %s49, %s52
      %p61 = scmp.eq.s32.totalorder %s21, 1
      %p62 = por %p60, %p61
      %p63 = scmp.ne.s32.totalorder %s52, %s53
      %p64 = scmp.eq.s32.totalorder %s21, 0
      %p65 = por %p63, %p64
      %p66 = scmp.ne.s32.totalorder %s52, %s53
      %p67 = scmp.eq.s32.totalorder %s22, 1
      %p68 = por %p66, %p67
      %p70 = scmp.ne.s32.totalorder %s53, %s69
      %p71 = scmp.eq.s32.totalorder %s22, 0
      %p72 = por %p70, %p71
      %s73 = sadd.s32 %s24, %s25
      %s74 = sadd.s32 %s38, %s34
      %s75 = ssub.s32 %s23, %s42
      %s76 = ssub.s32 %s73, %s74
      %s77 = sor.u32 %s75, %s76
      %p78 = scmp.eq.s32.totalorder %s77, 0
      %s80 = sadd.s32 %s79, 1
      %s81 = scalar_select %p78, %s79, %s80
      %p84 = pneg %p78
      %p85 = scmp.eq.s32.totalorder %s16, 1
      %p86 = por %p84, %p85
      %p87 = scmp.ne.s32.totalorder %s79, %s82
      %p88 = scmp.eq.s32.totalorder %s16, 0
      %p89 = por %p87, %p88
      %p90 = scmp.ne.s32.totalorder %s79, %s82
      %p91 = scmp.eq.s32.totalorder %s21, 1
      %p92 = por %p90, %p91
      %p93 = scmp.ne.s32.totalorder %s82, %s83
      %p94 = scmp.eq.s32.totalorder %s21, 0
      %p95 = por %p93, %p94
      %p96 = scmp.ne.s32.totalorder %s82, %s83
      %p97 = scmp.eq.s32.totalorder %s22, 1
      %p98 = por %p96, %p97
      %p100 = scmp.ne.s32.totalorder %s83, %s99
      %p101 = scmp.eq.s32.totalorder %s22, 0
      %p102 = por %p100, %p101
      %s103 = ssub.s32 %s23, %s42
      %s104 = ssub.s32 %s24, %s38
      %s105 = sor.u32 %s103, %s104
      %p106 = scmp.eq.s32.totalorder %s105, 0
      %s108 = sadd.s32 %s107, 1
      %s109 = scalar_select %p106, %s107, %s108
      %p112 = pneg %p106
      %p113 = scmp.eq.s32.totalorder %s16, 1
      %p114 = por %p112, %p113
      %p115 = scmp.ne.s32.totalorder %s107, %s110
      %p116 = scmp.eq.s32.totalorder %s16, 0
      %p117 = por %p115, %p116
      %p118 = scmp.ne.s32.totalorder %s107, %s110
      %p119 = scmp.eq.s32.totalorder %s21, 1
      %p120 = por %p118, %p119
      %p121 = scmp.ne.s32.totalorder %s110, %s111
      %p122 = scmp.eq.s32.totalorder %s21, 0
      %p123 = por %p121, %p122
      %p124 = scmp.ne.s32.totalorder %s110, %s111
      %p125 = scmp.eq.s32.totalorder %s22, 1
      %p126 = por %p124, %p125
      %p128 = scmp.ne.s32.totalorder %s111, %s127
      %p129 = scmp.eq.s32.totalorder %s22, 0
      %p130 = por %p128, %p129
      %s131 = ssub.s32 %s23, %s42
      %s132 = ssub.s32 %s24, %s38
      %s133 = sor.u32 %s131, %s132
      %p134 = scmp.eq.s32.totalorder %s133, 0
      %s136 = sadd.s32 %s135, 1
      %s137 = scalar_select %p134, %s135, %s136
      %p140 = pneg %p134
      %p141 = scmp.eq.s32.totalorder %s16, 1
      %p142 = por %p140, %p141
      %p143 = scmp.ne.s32.totalorder %s135, %s138
      %p144 = scmp.eq.s32.totalorder %s16, 0
      %p145 = por %p143, %p144
      %p146 = scmp.ne.s32.totalorder %s135, %s138
      %p147 = scmp.eq.s32.totalorder %s21, 1
      %p148 = por %p146, %p147
      %p149 = scmp.ne.s32.totalorder %s138, %s139
      %p150 = scmp.eq.s32.totalorder %s21, 0
      %p151 = por %p149, %p150
      %p152 = scmp.ne.s32.totalorder %s138, %s139
      %p153 = scmp.eq.s32.totalorder %s22, 1
      %p154 = por %p152, %p153
      %p156 = scmp.ne.s32.totalorder %s139, %s155
      %p157 = scmp.eq.s32.totalorder %s22, 0
      %p158 = por %p156, %p157
      %p159 = scmp.le.s32.totalorder 1, %s16
      %p160 = scmp.lt.s32.totalorder %s16, 3
      %p161 = pnand %p159, %p160
      %p162 = pneg %p161
      // Predicated region
      $region9: #{tpu_custom_call.1} parent=5 // pred_check
        _
      $region10: #{tpu_custom_call.1} parent=5 // pred_check_branch
        %164 = sbr.rel (%p161) target = $region12
      $region11: #{tpu_custom_call.1} parent=5 // pred_region
        %s165 = ssub.s32 %s16, 1
      $region12: #{tpu_custom_call.1} parent=5 // pred_fallthru
        _
      %p166 = scmp.lt.s32.totalorder %s16, 2
      // Predicated region
      $region13: #{tpu_custom_call.1} parent=5 // pred_check
        %p167 = pneg %p166
      $region14: #{tpu_custom_call.1} parent=5 // pred_check_branch
        %169 = sbr.rel (%p167) target = $region16
      $region15: #{tpu_custom_call.1} parent=5 // pred_region
        // Predicated region
        $region17: #{tpu_custom_call.1} parent=15 // pred_check
          %p170 = pneg %p59
        $region18: #{tpu_custom_call.1} parent=15 // pred_check_branch
          %172 = sbr.rel (%p170) target = $region20
        $region19: #{tpu_custom_call.1} parent=15 // pred_region
          %s173 = sand.u32 %s49, 1
          %s174 = scalar_lea.sflag [#allocation5], %s173
          %s175 = sand.u32 %s49, 1
          %s176 = smul.addr %s175, 8
          %s177 = scalar_lea.vmem [#allocation4], %s176
          %s178 = sadd.s32 %s24, %s25
          %s179 = smul.u32 2, %s178
          %s181 = ssub.s32 128, 128
          %182 = vsyncadd %s174, %s181
          %s183 = smul.addr %s23, 2
          %s184 = sadd.s32 %s179, %s183
          %s185 = smul.addr %s184, 64
          %s186 = scalar_lea.hbm %s0, %s185
          %s188 = sshll.u32 %s177, 4
          %s189 = int_to_ptr.vmem [resolvable:$true] %s188
          %191 = dma.hbm_to_vmem [thread:$0]  %s186, 128, %s189, %s174
        $region20: #{tpu_custom_call.1} parent=15 // pred_fallthru
          _
        // Predicated region
        $region21: #{tpu_custom_call.1} parent=15 // pred_check
          %p192 = pneg %p89
        $region22: #{tpu_custom_call.1} parent=15 // pred_check_branch
          %194 = sbr.rel (%p192) target = $region24
        $region23: #{tpu_custom_call.1} parent=15 // pred_region
          %s195 = sand.u32 %s79, 1
          %s196 = scalar_lea.sflag [#allocation7], %s195
          %s197 = sand.u32 %s79, 1
          %s198 = smul.addr %s197, 2
          %s199 = scalar_lea.vmem [#allocation6], %s198
          %s200 = sadd.s32 %s24, %s25
          %s201 = smul.u32 2, %s200
          %s203 = ssub.s32 32, 32
          %204 = vsyncadd %s196, %s203
          %s205 = smul.addr %s23, 2
          %s206 = sadd.s32 %s201, %s205
          %s207 = smul.addr %s206, 16
          %s208 = scalar_lea.hbm %s1, %s207
          %s210 = sshll.u32 %s199, 4
          %s211 = int_to_ptr.vmem [resolvable:$true] %s210
          %213 = dma.hbm_to_vmem [thread:$0]  %s208, 32, %s211, %s196
        $region24: #{tpu_custom_call.1} parent=15 // pred_fallthru
          _
      $region16: #{tpu_custom_call.1} parent=5 // pred_fallthru
        _
      %p214 = scmp.le.s32.totalorder 1, %s16
      %p215 = scmp.lt.s32.totalorder %s16, 3
      %p216 = pnand %p214, %p215
      %p217 = pneg %p216
      // Predicated region
      $region25: #{tpu_custom_call.1} parent=5 // pred_check
        _
      $region26: #{tpu_custom_call.1} parent=5 // pred_check_branch
        %219 = sbr.rel (%p216) target = $region28
      $region27: #{tpu_custom_call.1} parent=5 // pred_region
        %s220 = ssub.s32 %s16, 1
        %s221 = sand.u32 %s52, 1
        %s222 = scalar_lea.sflag [#allocation5], %s221
        %s223 = sand.u32 %s52, 1
        %s224 = smul.addr %s223, 8
        %s225 = scalar_lea.vmem [#allocation4], %s224
        // Predicated region
        $region29: #{tpu_custom_call.1} parent=27 // pred_check
          %p226 = pneg %p65
        $region30: #{tpu_custom_call.1} parent=27 // pred_check_branch
          %228 = sbr.rel (%p226) target = $region32
        $region31: #{tpu_custom_call.1} parent=27 // pred_region
          %229 = dma.done %s222, 128
        $region32: #{tpu_custom_call.1} parent=27 // pred_fallthru
          _
        %s230 = sand.u32 %s82, 1
        %s231 = scalar_lea.sflag [#allocation7], %s230
        %s232 = sand.u32 %s82, 1
        %s233 = smul.addr %s232, 2
        %s234 = scalar_lea.vmem [#allocation6], %s233
        // Predicated region
        $region33: #{tpu_custom_call.1} parent=27 // pred_check
          %p235 = pneg %p95
        $region34: #{tpu_custom_call.1} parent=27 // pred_check_branch
          %237 = sbr.rel (%p235) target = $region36
        $region35: #{tpu_custom_call.1} parent=27 // pred_region
          %238 = dma.done %s231, 32
        $region36: #{tpu_custom_call.1} parent=27 // pred_fallthru
          _
        %s239 = sand.u32 %s52, 1
        %s240 = scalar_lea.sflag [#allocation5], %s239
        %s241 = sand.u32 %s52, 1
        %s242 = smul.addr %s241, 8
        %s243 = scalar_lea.vmem [#allocation4], %s242
        %p244 = pneg %p65
        %p245 = pneg %p62
        %s246 = sand.u32 %s82, 1
        %s247 = scalar_lea.sflag [#allocation7], %s246
        %s248 = sand.u32 %s82, 1
        %s249 = smul.addr %s248, 2
        %s250 = scalar_lea.vmem [#allocation6], %s249
        %p251 = pneg %p95
        %p252 = pneg %p92
        %p253 = pneg %p123
        %p254 = pneg %p120
        %p255 = scmp.lt.s32.totalorder %s26, 1
        %s256 = scalar_select %p255, %s26, 1
        %p257 = scmp.lt.s32.totalorder %s27, 0
        %s258 = scalar_select %p257, %s27, 0
        %s259 = sadd.s32 %s258, %s256
        %s260 = smul.addr %s259, 4
        %s261 = scalar_lea.vmem %s2, %s260
        %p262 = pneg %p151
        %p263 = pneg %p148
        %p264 = scmp.lt.s32.totalorder %s26, 1
        %s265 = scalar_select %p264, %s26, 1
        %p266 = scmp.lt.s32.totalorder %s27, 0
        %s267 = scalar_select %p266, %s27, 0
        %s268 = sadd.s32 %s267, %s265
        %s269 = smul.addr %s268, 4
        %s270 = scalar_lea.vmem %s3, %s269
        %s271 = sadd.s32 %s27, %s28
        %s272 = smul.u32 2, %s271
        %s273 = sadd.s32 %s27, %s28
        %s274 = smul.u32 2, %s273
        %p275 = scmp.lt.s32.totalorder %s26, 1
        %s276 = scalar_select %p275, %s26, 1
        %p277 = scmp.lt.s32.totalorder %s27, 0
        %s278 = scalar_select %p277, %s27, 0
        %s279 = sadd.s32 %s278, %s276
        %s280 = smul.addr %s279, 4
        %s281 = scalar_lea.vmem %s2, %s280
        %p282 = scmp.lt.s32.totalorder %s26, 1
        %s283 = scalar_select %p282, %s26, 1
        %p284 = scmp.lt.s32.totalorder %s27, 0
        %s285 = scalar_select %p284, %s27, 0
        %s286 = sadd.s32 %s285, %s283
        %s287 = smul.addr %s286, 4
        %s288 = scalar_lea.vmem %s3, %s287
        %p289 = scmp.eq.s32.totalorder %s28, 0
        // Predicated region
        $region37: #{tpu_custom_call.1} parent=27 // pred_check
          %p290 = pneg %p289
        $region38: #{tpu_custom_call.1} parent=27 // pred_check_branch
          %292 = sbr.rel (%p290) target = $region40
        $region39: #{tpu_custom_call.1} parent=27 // pred_region
          %293 = vst [vmem:[#allocation2] sm:$0xff] 0.0
          %294 = vst [vmem:[#allocation3] sm:$0xff] 0.0
        $region40: #{tpu_custom_call.1} parent=27 // pred_fallthru
          _
        %v295 = vlaneseq
        %v296 = vshrl.u32 %v295, 7
        %v297 = vld [vmem:[%s225] sm:$0xff]
        %v298 = vld [vmem:[%s234] sm:$0x3]
        %v300 = vcombine.high %v297, %v297
        %vm302 = vcmask 1043456
        %v303 = vsel %vm302, %v297, -inf
        %v304 = vrot.slane %v303, 4
        %v305 = vmax.f32 %v303, %v304
        %v306 = vrot.slane %v305, 2
        %v307 = vmax.f32 %v305, %v306
        %v308 = vrot.slane %v307, 1
        %v309 = vmax.f32 %v307, %v308
        %v310 = vsel %vm302, %v300, -inf
        %v311 = vrot.slane %v310, 4
        %v312 = vmax.f32 %v310, %v311
        %v313 = vrot.slane %v312, 2
        %v314 = vmax.f32 %v312, %v313
        %v315 = vrot.slane %v314, 1
        %v316 = vmax.f32 %v314, %v315
        %v319 = vcombine.low %v309, %v316
        %v321 = vsub.f32 %v297, %v319
        %v322 = vmul.f32 %v321, 1.442695
        %v323 = vpow.pop %v322
        %v325 = vcombine.high %v323, %v323
        %v327 = vsel %vm302, %v323, 0.0
        %v328 = vrot.slane %v327, 4
        %v329 = vadd.f32 %v327, %v328
        %v330 = vrot.slane %v329, 2
        %v331 = vadd.f32 %v329, %v330
        %v332 = vrot.slane %v331, 1
        %v333 = vadd.f32 %v331, %v332
        %v334 = vsel %vm302, %v325, 0.0
        %v335 = vrot.slane %v334, 4
        %v336 = vadd.f32 %v334, %v335
        %v337 = vrot.slane %v336, 2
        %v338 = vadd.f32 %v336, %v337
        %v339 = vrot.slane %v338, 1
        %v340 = vadd.f32 %v338, %v339
        %v341 = vrcp.pop %v333
        %v342 = vrcp.pop %v340
        %v345 = vcombine.low %v341, %v342
        %v347 = vmul.f32 %v323, %v345
        %v348 = vlaneseq
        %v349 = vshrl.u32 %v348, 7
        %v350 = vsub.s32 0, %v349
        %v351 = vrot.slane %v298, %v350
        %v352 = vlaneseq
        %v353 = vshrl.u32 %v352, 7
        %v354 = vsub.s32 1, %v353
        %v355 = vrot.slane %v298, %v354
        %vm356 = vcmp.eq.s32.totalorder %v296, %v351
        %vm357 = vcmp.eq.s32.totalorder %v296, %v355
        %v358 = vsel %vm356, 1, 0
        %v359 = vsel %vm357, 1, 0
        %v360 = vcvt.s32.f32 %v358
        %v361 = vcvt.s32.f32 %v359
        %v363 = vcombine.high %v347, %v347
        %v365 = vsel %vm356, %v347, 0.0
        %v366 = vsel %vm357, %v363, 0.0
        %v369 = vcombine.low %v360, %v361
        %v371 = vadd.f32 %v347, %v369
        %v372 = vld [vmem:[#allocation2] sm:$0xff]
        %v375 = vcombine.low %v365, %v366
        %v377 = vadd.f32 %v372, %v375
        %378 = vst [vmem:[#allocation2] sm:$0xff] %v377
        %v379 = vld [vmem:[#allocation3] sm:$0xff]
        %v380 = vadd.f32 %v379, %v371
        %381 = vst [vmem:[#allocation3] sm:$0xff] %v380
        // Predicated region
        $region41: #{tpu_custom_call.1} parent=27 // pred_check
          %p382 = pneg %p289
        $region42: #{tpu_custom_call.1} parent=27 // pred_check_branch
          %384 = sbr.rel (%p382) target = $region44
        $region43: #{tpu_custom_call.1} parent=27 // pred_region
          %v385 = vld [vmem:[#allocation2] sm:$0xff]
          %v387 = vcombine.high %v385, %v385
          %v389 = vsel %vm302, %v385, 0.0
          %v390 = vsel %vm302, %v387, 0.0
          %v391 = vadd.f32 %v389, %v390
          %392 = vadd.xlane.f32.xlu0 %v391
          %v393 = vpop.xlane.xlu0 %392
          %vm394 = vcmask 3072
          %395 = vst.msk [vmem:[%s281] sm:$0xf] %vm394, %v393
          %v396 = vld [vmem:[#allocation3] sm:$0xff]
          %v398 = vcombine.high %v396, %v396
          %v400 = vsel %vm302, %v396, 0.0
          %v401 = vsel %vm302, %v398, 0.0
          %v402 = vadd.f32 %v400, %v401
          %403 = vadd.xlane.f32.xlu0 %v402
          %v404 = vpop.xlane.xlu0 %403
          %405 = vst.msk [vmem:[%s288] sm:$0xf] %vm394, %v404
        $region44: #{tpu_custom_call.1} parent=27 // pred_fallthru
          _
        %p406 = scmp.lt.s32.totalorder %s26, 1
        %s407 = scalar_select %p406, %s26, 1
        %p408 = scmp.lt.s32.totalorder %s27, 0
        %s409 = scalar_select %p408, %s27, 0
        %s410 = sadd.s32 %s409, %s407
        %s411 = smul.addr %s410, 4
        %s412 = scalar_lea.vmem %s2, %s411
        %p413 = scmp.lt.s32.totalorder %s26, 1
        %s414 = scalar_select %p413, %s26, 1
        %p415 = scmp.lt.s32.totalorder %s27, 0
        %s416 = scalar_select %p415, %s27, 0
        %s417 = sadd.s32 %s416, %s414
        %s418 = smul.addr %s417, 4
        %s419 = scalar_lea.vmem %s3, %s418
        // Predicated region
        $region45: #{tpu_custom_call.1} parent=27 // pred_check
          %p420 = pneg %p120
        $region46: #{tpu_custom_call.1} parent=27 // pred_check_branch
          %422 = sbr.rel (%p420) target = $region48
        $region47: #{tpu_custom_call.1} parent=27 // pred_region
          _
        $region48: #{tpu_custom_call.1} parent=27 // pred_fallthru
          _
        // Predicated region
        $region49: #{tpu_custom_call.1} parent=27 // pred_check
          %p423 = pneg %p148
        $region50: #{tpu_custom_call.1} parent=27 // pred_check_branch
          %425 = sbr.rel (%p423) target = $region52
        $region51: #{tpu_custom_call.1} parent=27 // pred_region
          _
        $region52: #{tpu_custom_call.1} parent=27 // pred_fallthru
          _
      $region28: #{tpu_custom_call.1} parent=5 // pred_fallthru
        _
      %p426 = scmp.le.s32.totalorder 2, %s16
      // Predicated region
      $region53: #{tpu_custom_call.1} parent=5 // pred_check
        %p427 = pneg %p426
      $region54: #{tpu_custom_call.1} parent=5 // pred_check_branch
        %429 = sbr.rel (%p427) target = $region56
      $region55: #{tpu_custom_call.1} parent=5 // pred_region
        %s430 = ssub.s32 %s16, 2
        // Predicated region
        $region57: #{tpu_custom_call.1} parent=55 // pred_check
          %p431 = pneg %p126
        $region58: #{tpu_custom_call.1} parent=55 // pred_check_branch
          %433 = sbr.rel (%p431) target = $region60
        $region59: #{tpu_custom_call.1} parent=55 // pred_region
          %p434 = scmp.lt.s32.totalorder %s29, 1
          %s435 = scalar_select %p434, %s29, 1
          %p436 = scmp.lt.s32.totalorder %s30, 0
          %s437 = scalar_select %p436, %s30, 0
          %s438 = sadd.s32 %s437, %s435
          %s439 = smul.addr %s438, 4
          %s440 = scalar_lea.vmem %s2, %s439
        $region60: #{tpu_custom_call.1} parent=55 // pred_fallthru
          _
        // Predicated region
        $region61: #{tpu_custom_call.1} parent=55 // pred_check
          %p441 = pneg %p154
        $region62: #{tpu_custom_call.1} parent=55 // pred_check_branch
          %443 = sbr.rel (%p441) target = $region64
        $region63: #{tpu_custom_call.1} parent=55 // pred_region
          %p444 = scmp.lt.s32.totalorder %s29, 1
          %s445 = scalar_select %p444, %s29, 1
          %p446 = scmp.lt.s32.totalorder %s30, 0
          %s447 = scalar_select %p446, %s30, 0
          %s448 = sadd.s32 %s447, %s445
          %s449 = smul.addr %s448, 4
          %s450 = scalar_lea.vmem %s3, %s449
        $region64: #{tpu_custom_call.1} parent=55 // pred_fallthru
          _
      $region56: #{tpu_custom_call.1} parent=5 // pred_fallthru
        _
    $region6: #{tpu_custom_call.1} parent=1 // loop_footer
      %s20 = sadd.s32 1, %s16
    $region7: #{tpu_custom_call.1} parent=1 // loop_footer_branch
      %15 = sbr.rel target = $region3
    $region8: #{tpu_custom_call.1} parent=1 // loop_exit
      _
    %451 = vsyncpa [#allocation5], 1
    %s452 = scalar_lea.sflag [#allocation5], 1
    %453 = vsyncpa %s452, 1
    %454 = vsyncpa [#allocation7], 1
    %s455 = scalar_lea.sflag [#allocation7], 1
    %456 = vsyncpa %s455, 1

</llo_original>
